<compile_context>
chip_gen: v7x
topology: tpu7x:2x2x1
jax: 0.10.0
libtpu: 0.0.40
codegen_flags: <defaults>
</compile_context>

<pallas_src>
import functools

import jax
import jax.numpy as jnp
from jax.experimental import pallas as pl
from jax.experimental.pallas import tpu as pltpu


def net_kernel(seed_ref, xT_ref, w1T_ref, b1_ref, w2_ref, b2_ref, o_ref, *,
               dropout_p, apply_dropout, chunk_lanes, lanes_pad):
    # fc1 + ReLU — ONE lane-dense MXU pass: (dim, p_pad) @ (p_pad, chunk_lanes),
    # f32 accumulate.  Zero-padded K columns contribute nothing.
    hT = jnp.dot(w1T_ref[...], xT_ref[...],
                 preferred_element_type=jnp.float32) + b1_ref[...]
    hT = jnp.maximum(hT, 0.0)                       # (dim, chunk_lanes)

    # Dropout(p) — MC-dropout / training mode only.  Counter-based integer-hash
    # PRNG (splitmix32-style finalizer) over the global element index; the
    # (sample, batch) identity lives in the lane index, so every MC sample gets
    # an independent mask without any per-sample grid step.
    if apply_dropout:
        shape = hT.shape
        row = jax.lax.broadcasted_iota(jnp.uint32, shape, 0)      # hidden unit
        col = jax.lax.broadcasted_iota(jnp.uint32, shape, 1)      # lane in chunk
        lane = jnp.uint32(chunk_lanes) * pl.program_id(0).astype(jnp.uint32) + col
        seed = seed_ref[0].astype(jnp.uint32)
        v = row * jnp.uint32(lanes_pad) + lane                    # unique counter
        v = v + seed * jnp.uint32(0x9E3779B9)
        v = v ^ (v >> 16)
        v = v * jnp.uint32(0x7FEB352D)
        v = v ^ (v >> 15)
        v = v * jnp.uint32(0x846CA68B)
        v = v ^ (v >> 16)
        # drop if v < thresh  (dropout_p < 1.0 is asserted in the wrapper)
        thresh = jnp.uint32(int(dropout_p * 4294967296.0) & 0xFFFFFFFF)
        keep = v >= thresh
        hT = jnp.where(keep, hT * jnp.float32(1.0 / (1.0 - dropout_p)),
                       jnp.float32(0.0))

    # fc2 + sigmoid — output width 1, so VPU multiply + sublane (XLU) reduce
    # instead of a second MXU round-trip.  b2 is a scalar read from SMEM.
    logits = jnp.sum(hT * w2_ref[...], axis=0, keepdims=True) + b2_ref[0]
    o_ref[...] = jax.nn.sigmoid(logits)             # (1, chunk_lanes) lane-dense


def net_forward(x, w1, b1, w2, b2, seed, *, dropout_p=0.9, apply_dropout=False,
                n_samples=1):
    """Run `n_samples` MC-dropout forward passes fused into the lane axis.

    x: (batch, p), w1: (p, dim), b1: (dim,), w2: (dim, 1), b2: (1,)
    Returns (n_samples, batch) probabilities.
    """
    batch, p = x.shape
    dim = w1.shape[1]
    if not apply_dropout:
        n_samples = 1                      # deterministic -> one sample suffices
    else:
        assert 0.0 <= dropout_p < 1.0, "dropout_p must be in [0, 1)"

    # Hardware-aligned shapes: pad K to a sublane multiple, lanes to a multiple
    # of 128.  Padded lanes produce garbage and are sliced off before returning.
    p_pad = ((p + 7) // 8) * 8
    lanes_total = n_samples * batch
    lanes_pad = ((lanes_total + 127) // 128) * 128

    # Per-step lane chunk: >=128 lanes; grow to amortize per-step overhead, but
    # keep >=2 chunks when there is enough work so v7x's 2 TCs both get chunks.
    max_chunk = lanes_pad if lanes_pad <= 128 else lanes_pad // 2
    chunk = 128
    while chunk * 2 <= max_chunk and lanes_pad % (chunk * 2) == 0:
        chunk *= 2
    n_chunks = lanes_pad // chunk

    # Host-side layout plumbing (done once in XLA, not per grid step):
    #   xT  : (p_pad, lanes_pad)  x replicated across samples, batch on lanes
    #   w1T : (dim, p_pad)        fc1 weight pre-transposed -> hT = W1 @ xT
    xT = jnp.zeros((p_pad, lanes_pad), jnp.float32)
    xT = xT.at[:p, :lanes_total].set(jnp.tile(x.astype(jnp.float32).T,
                                              (1, n_samples)))
    w1T = jnp.zeros((dim, p_pad), jnp.float32).at[:, :p].set(
        w1.astype(jnp.float32).T)
    b1c = jnp.reshape(b1, (dim, 1)).astype(jnp.float32)
    w2c = jnp.reshape(w2, (dim, 1)).astype(jnp.float32)
    b2s = jnp.reshape(b2, (1,)).astype(jnp.float32)
    seed = jnp.asarray(seed, dtype=jnp.int32).reshape((1,))

    kernel = functools.partial(net_kernel, dropout_p=dropout_p,
                               apply_dropout=apply_dropout,
                               chunk_lanes=chunk, lanes_pad=lanes_pad)

    out = pl.pallas_call(
        kernel,
        out_shape=jax.ShapeDtypeStruct((1, lanes_pad), jnp.float32),
        grid_spec=pltpu.PrefetchScalarGridSpec(
            num_scalar_prefetch=1,               # seed lives in SMEM
            grid=(n_chunks,),                    # one step per >=128-lane chunk
            in_specs=[
                pl.BlockSpec((p_pad, chunk), lambda c, sref: (0, c)),
                # constant index_map -> weights resident in VMEM across chunks
                pl.BlockSpec((dim, p_pad), lambda c, sref: (0, 0)),
                pl.BlockSpec((dim, 1), lambda c, sref: (0, 0)),
                pl.BlockSpec((dim, 1), lambda c, sref: (0, 0)),
                # single scalar b2 -> SMEM, not a pipelined VMEM tile
                pl.BlockSpec(memory_space=pltpu.MemorySpace.SMEM),
            ],
            out_specs=pl.BlockSpec((1, chunk), lambda c, sref: (0, c)),
        ),
        compiler_params=pltpu.CompilerParams(
            # chunks are fully independent -> shard across v7x's 2 TCs
            dimension_semantics=("parallel",),
        ),
    )(seed, xT, w1T, b1c, w2c, b2s)

    return out[0, :lanes_total].reshape(n_samples, batch)


def init_params(key, p, dim):
    # PyTorch nn.Linear default init: U[-1/sqrt(fan_in), 1/sqrt(fan_in)].
    k1, k2, k3, k4 = jax.random.split(key, 4)
    lim1 = 1.0 / jnp.sqrt(jnp.float32(p))
    lim2 = 1.0 / jnp.sqrt(jnp.float32(dim))
    w1 = jax.random.uniform(k1, (p, dim), jnp.float32, -lim1, lim1)
    b1 = jax.random.uniform(k2, (dim,), jnp.float32, -lim1, lim1)
    w2 = jax.random.uniform(k3, (dim, 1), jnp.float32, -lim2, lim2)
    b2 = jax.random.uniform(k4, (1,), jnp.float32, -lim2, lim2)
    return w1, b1, w2, b2


if __name__ == "__main__":
    # Raisin dataset: p = 7 numeric features; hidden_dim = 32; small batch = 8.
    batch, p, dim = 8, 7, 32

    key = jax.random.PRNGKey(0)
    kx, kp = jax.random.split(key)
    x = jax.random.normal(kx, (batch, p), jnp.float32)
    w1, b1, w2, b2 = init_params(kp, p, dim)
    seed = jnp.array([1234], dtype=jnp.int32)

    # Eval-mode forward (dropout is identity) — matches model.eval().
    out_eval = net_forward(x, w1, b1, w2, b2, seed, apply_dropout=False)
    out_eval = jax.block_until_ready(out_eval)

    # MC-dropout: 16 stochastic samples fused into a single 128-lane step.
    n_samples = 16
    out_mc = net_forward(x, w1, b1, w2, b2, seed, dropout_p=0.9,
                         apply_dropout=True, n_samples=n_samples)
    out_mc = jax.block_until_ready(out_mc)

    # Cross-check eval path against a pure-JAX reference.
    ref = jax.nn.sigmoid(jnp.maximum(x @ w1 + b1, 0.0) @ w2 + b2)[:, 0]
    assert out_eval.shape == (1, batch)
    assert jnp.allclose(out_eval[0], ref, atol=1e-5), "eval mismatch vs reference"

    # Sanity on MC samples: valid probabilities and non-degenerate across samples.
    assert out_mc.shape == (n_samples, batch)
    assert bool(jnp.all(jnp.isfinite(out_mc)))
    assert bool(jnp.all((out_mc >= 0.0) & (out_mc <= 1.0)))
    assert not bool(jnp.all(out_mc == out_mc[0:1])), "MC samples are degenerate"

    print("KERNEL_OK")
</pallas_src>

<mosaic_0001>
module attributes {stable_mosaic.version = 11 : i64} {
  func.func @net_kernel(%arg0: i32, %arg1: memref<1xi32, #tpu.memory_space<smem>>, %arg2: memref<8x128xf32, #tpu.memory_space<vmem>>, %arg3: memref<32x8xf32, #tpu.memory_space<vmem>>, %arg4: memref<32x1xf32, #tpu.memory_space<vmem>>, %arg5: memref<32x1xf32, #tpu.memory_space<vmem>>, %arg6: memref<1xf32, #tpu.memory_space<smem>>, %arg7: memref<1x128xf32, #tpu.memory_space<vmem>>) attributes {dimension_semantics = [#tpu.dimension_semantics<parallel>], iteration_bounds = array<i64: 1>, scalar_prefetch = 1 : i64, scratch_operands = 0 : i64, tpu.core_type = #tpu.core_type<tc>, window_params = [{transform_indices = @transform_0, window_bounds = array<i64: 8, 128>}, {pipeline_mode = #tpu.pipeline_mode<synchronous>, transform_indices = @transform_1, window_bounds = array<i64: 32, 8>}, {pipeline_mode = #tpu.pipeline_mode<synchronous>, transform_indices = @transform_2, window_bounds = array<i64: 32, 1>}, {pipeline_mode = #tpu.pipeline_mode<synchronous>, transform_indices = @transform_3, window_bounds = array<i64: 32, 1>}, {transform_indices = @transform_4, window_bounds = array<i64: 1>}, {transform_indices = @transform_5, window_bounds = array<i64: 1, 128>}]} {
    %c0 = arith.constant 0 : index
    %c0_0 = arith.constant 0 : index
    %0 = vector.load %arg3[%c0, %c0_0] : memref<32x8xf32, #tpu.memory_space<vmem>>, vector<32x8xf32>
    %c0_1 = arith.constant 0 : index
    %c0_2 = arith.constant 0 : index
    %1 = vector.load %arg2[%c0_1, %c0_2] : memref<8x128xf32, #tpu.memory_space<vmem>>, vector<8x128xf32>
    %cst = arith.constant dense<0.000000e+00> : vector<32x128xf32>
    %2 = tpu.matmul %0, %1, %cst {dimension_numbers = #tpu.dot_dimension_numbers<[1], [0], [0], [1], [0, 0, 1, 1], [], []>} : vector<32x8xf32>, vector<8x128xf32>, vector<32x128xf32> -> vector<32x128xf32>
    %c0_3 = arith.constant 0 : index
    %c0_4 = arith.constant 0 : index
    %3 = vector.load %arg4[%c0_3, %c0_4] : memref<32x1xf32, #tpu.memory_space<vmem>>, vector<32x1xf32>
    %4 = vector.broadcast %3 : vector<32x1xf32> to vector<32x128xf32>
    %5 = arith.addf %2, %4 : vector<32x128xf32>
    %cst_5 = arith.constant 0.000000e+00 : f32
    %6 = vector.broadcast %cst_5 : f32 to vector<32x128xf32>
    %7 = arith.maximumf %5, %6 : vector<32x128xf32>
    %c0_6 = arith.constant 0 : index
    %c0_7 = arith.constant 0 : index
    %8 = vector.load %arg5[%c0_6, %c0_7] : memref<32x1xf32, #tpu.memory_space<vmem>>, vector<32x1xf32>
    %9 = vector.broadcast %8 : vector<32x1xf32> to vector<32x128xf32>
    %10 = arith.mulf %7, %9 : vector<32x128xf32>
    %cst_8 = arith.constant dense<0.000000e+00> : vector<128xf32>
    %11 = vector.multi_reduction <add>, %10, %cst_8 [0] : vector<32x128xf32> to vector<128xf32>
    %12 = vector.shape_cast %11 : vector<128xf32> to vector<1x128xf32>
    %c0_9 = arith.constant 0 : index
    %13 = memref.load %arg6[%c0_9] : memref<1xf32, #tpu.memory_space<smem>>
    %14 = vector.broadcast %13 : f32 to vector<1x128xf32>
    %15 = arith.addf %12, %14 : vector<1x128xf32>
    %16 = arith.negf %15 : vector<1x128xf32>
    %17 = math.exp %16 : vector<1x128xf32>
    %cst_10 = arith.constant 1.000000e+00 : f32
    %18 = vector.broadcast %cst_10 : f32 to vector<1x128xf32>
    %19 = arith.addf %18, %17 : vector<1x128xf32>
    %20 = arith.divf %18, %19 : vector<1x128xf32>
    %c0_11 = arith.constant 0 : index
    %c0_12 = arith.constant 0 : index
    %21 = vector.load %arg7[%c0_11, %c0_12] : memref<1x128xf32, #tpu.memory_space<vmem>>, vector<1x128xf32>
    tpu.vector_store %arg7[%c0_11, %c0_12], %20 {strides = array<i32>} : memref<1x128xf32, #tpu.memory_space<vmem>>, vector<1x128xf32>,
    return
  }
  func.func @transform_0(%arg0: i32, %arg1: memref<1xi32, #tpu.memory_space<smem>>) -> (i32, i32) {
    %c0_i32 = arith.constant 0 : i32
    %c0_i32_0 = arith.constant 0 : i32
    return %c0_i32, %arg0 : i32, i32
  }
  func.func @transform_1(%arg0: i32, %arg1: memref<1xi32, #tpu.memory_space<smem>>) -> (i32, i32) {
    %c0_i32 = arith.constant 0 : i32
    %c0_i32_0 = arith.constant 0 : i32
    %c0_i32_1 = arith.constant 0 : i32
    return %c0_i32, %c0_i32_0 : i32, i32
  }
  func.func @transform_2(%arg0: i32, %arg1: memref<1xi32, #tpu.memory_space<smem>>) -> (i32, i32) {
    %c0_i32 = arith.constant 0 : i32
    %c0_i32_0 = arith.constant 0 : i32
    %c0_i32_1 = arith.constant 0 : i32
    return %c0_i32, %c0_i32_0 : i32, i32
  }
  func.func @transform_3(%arg0: i32, %arg1: memref<1xi32, #tpu.memory_space<smem>>) -> (i32, i32) {
    %c0_i32 = arith.constant 0 : i32
    %c0_i32_0 = arith.constant 0 : i32
    %c0_i32_1 = arith.constant 0 : i32
    return %c0_i32, %c0_i32_0 : i32, i32
  }
  func.func @transform_4(%arg0: i32, %arg1: memref<1xi32, #tpu.memory_space<smem>>) -> i32 {
    %c0_i32 = arith.constant 0 : i32
    %c0_i32_0 = arith.constant 0 : i32
    return %c0_i32 : i32
  }
  func.func @transform_5(%arg0: i32, %arg1: memref<1xi32, #tpu.memory_space<smem>>) -> (i32, i32) {
    %c0_i32 = arith.constant 0 : i32
    %c0_i32_0 = arith.constant 0 : i32
    return %c0_i32, %arg0 : i32, i32
  }
}

</mosaic_0001>

<llo_original>
// kernel: tpu_custom_call.1
$region0: #{tpu_custom_call.1}
  #allocation0 [shape = 'u32[]', space=smem, size = 0x4, offset = 0x4, fixed_abs, tag = 'smem constant byte address 0x4 - core index']
  #allocation1 [shape = 'u32[144,128]{1,0:T(1,128)}', space=vmem, size = 0x12000, scoped, tag = 'internal scratch']
  #allocation2 [shape = 's32[1]{0}', space=sflag, size = 0x4, scoped, tag = 'scoped memory for tpu_custom_call.1']
  #allocation3 [shape = 's32[1]{0:T(128)S(6)}', space=smem, size = 0x200, scoped, tag = 'prefetched SMEM operand 0']
  #allocation4 [shape = 'f32[1]{0:T(128)S(6)}', space=smem, size = 0x200, scoped, tag = 'scoped memory for tpu_custom_call.1']
  %s0 = inlined_call_operand.<no memory space> [shape: s32[1], index: 0, kind: input, shape index: {}]
  %s1 = inlined_call_operand.vmem [shape: f32[8,128], index: 1, kind: input, shape index: {}]
  %s2 = inlined_call_operand.vmem [shape: f32[32,8], index: 2, kind: input, shape index: {}]
  %s3 = inlined_call_operand.vmem [shape: f32[32,1], index: 3, kind: input, shape index: {}]
  %s4 = inlined_call_operand.vmem [shape: f32[32,1], index: 4, kind: input, shape index: {}]
  %s5 = inlined_call_operand.<no memory space> [shape: f32[1], index: 5, kind: input, shape index: {}]
  %s6 = inlined_call_operand.hbm [shape: f32[1,128], index: 6, kind: output, shape index: {}]
  %s7 = sld [smem:[#allocation0]]
  $region30: #{tpu_custom_call.1} parent=0
    _
  %s9 = ssub.s32 1, %s7
  %s10 = scalar_select 0, %s9, %s7
  %11 = sst [smem:[#allocation3]] %s0
  %12 = sst [smem:[#allocation4]] %s5
  $region1: #{tpu_custom_call.1} parent=0
    #allocation5 [shape = 'u8[512]{0}', space=vmem, size = 0x400, scoped, tag = 'output window, operand 0, single buffered']
    #allocation6 [shape = 's32[1]{0}', space=sflag, size = 0x4, scoped, tag = 'scoped memory for tpu_custom_call.1']
    %13 = vsyncpa [#allocation6], 0
    // Predicated region
    $region2: #{tpu_custom_call.1} parent=1 // pred_check
      _
    $region3: #{tpu_custom_call.1} parent=1 // pred_check_branch
      %15 = sbr.rel (0) target = $region5
    $region4: #{tpu_custom_call.1} parent=1 // pred_region
      _
    $region5: #{tpu_custom_call.1} parent=1 // pred_fallthru
      _
    // Predicated region
    $region6: #{tpu_custom_call.1} parent=1 // pred_check
      _
    $region7: #{tpu_custom_call.1} parent=1 // pred_check_branch
      %17 = sbr.rel (0) target = $region9
    $region8: #{tpu_custom_call.1} parent=1 // pred_region
      _
    $region9: #{tpu_custom_call.1} parent=1 // pred_fallthru
      _
    // Predicated region
    $region10: #{tpu_custom_call.1} parent=1 // pred_check
      _
    $region11: #{tpu_custom_call.1} parent=1 // pred_check_branch
      %19 = sbr.rel (0) target = $region13
    $region12: #{tpu_custom_call.1} parent=1 // pred_region
      _
    $region13: #{tpu_custom_call.1} parent=1 // pred_fallthru
      _
    // Predicated region
    $region14: #{tpu_custom_call.1} parent=1 // pred_check
      _
    $region15: #{tpu_custom_call.1} parent=1 // pred_check_branch
      %21 = sbr.rel (0) target = $region17
    $region16: #{tpu_custom_call.1} parent=1 // pred_region
      _
    $region17: #{tpu_custom_call.1} parent=1 // pred_fallthru
      _
    // Predicated region
    $region18: #{tpu_custom_call.1} parent=1 // pred_check
      _
    $region19: #{tpu_custom_call.1} parent=1 // pred_check_branch
      %23 = sbr.rel (0) target = $region21
    $region20: #{tpu_custom_call.1} parent=1 // pred_region
      _
    $region21: #{tpu_custom_call.1} parent=1 // pred_fallthru
      _
    %v24 = vld [vmem:[%s2] sm:$0xff]
    %v25 = vld [vmem:[%s2 + $0x8] sm:$0xff]
    %v26 = vld [vmem:[%s2 + $0x10] sm:$0xff]
    %v27 = vld [vmem:[%s2 + $0x18] sm:$0xff]
    %v28 = vld [vmem:[%s1] sm:$0xff]
    %v29 = vld [vmem:[%s3] sm:$0xff]
    %v30 = vld [vmem:[%s3 + $0x8] sm:$0xff]
    %v31 = vld [vmem:[%s3 + $0x10] sm:$0xff]
    %v32 = vld [vmem:[%s3 + $0x18] sm:$0xff]
    %34 = vset.pattern.permute.xlu0 0
    %35 = vperm.xlu0 %34, %v29
    %v36 = vpop.permute.xlu0 %35
    %39 = vset.pattern.permute.xlu0 0
    %40 = vperm.xlu0 %39, %v30
    %v41 = vpop.permute.xlu0 %40
    %44 = vset.pattern.permute.xlu0 0
    %45 = vperm.xlu0 %44, %v31
    %v46 = vpop.permute.xlu0 %45
    %49 = vset.pattern.permute.xlu0 0
    %50 = vperm.xlu0 %49, %v32
    %v51 = vpop.permute.xlu0 %50
    %vm53 = vcmask 64512
    %v55 = vsel %vm53, %v24, 0
    %v58 = vsel %vm53, %v25, 0
    %v61 = vsel %vm53, %v26, 0
    %v64 = vsel %vm53, %v27, 0
    %66 = vmatprep.subr.mxu0 0.0
    %67 = vmatpush1.msra.mxu0 %v28
    %68 = vmatprep.subr.mxu0 0.0
    %69 = vmatpush1.msra.mxu0 0.0
    %70 = vmatprep.subr.mxu0 0.0
    %71 = vmatpush1.msra.mxu0 0.0
    %72 = vmatprep.subr.mxu0 0.0
    %73 = vmatpush1.msra.mxu0 0.0
    %74 = vmatprep.subr.mxu0 0.0
    %75 = vmatpush1.msra.mxu0 0.0
    %76 = vmatprep.subr.mxu0 0.0
    %77 = vmatpush1.msra.mxu0 0.0
    %78 = vmatprep.subr.mxu0 0.0
    %79 = vmatpush1.msra.mxu0 0.0
    %80 = vmatprep.subr.mxu0 0.0
    %81 = vmatpush1.msra.mxu0 0.0
    %82 = vmatprep.subr.mxu0 0.0
    %83 = vmatpush1.msra.mxu0 0.0
    %84 = vmatprep.subr.mxu0 0.0
    %85 = vmatpush1.msra.mxu0 0.0
    %86 = vmatprep.subr.mxu0 0.0
    %87 = vmatpush1.msra.mxu0 0.0
    %88 = vmatprep.subr.mxu0 0.0
    %89 = vmatpush1.msra.mxu0 0.0
    %90 = vmatprep.subr.mxu0 0.0
    %91 = vmatpush1.msra.mxu0 0.0
    %92 = vmatprep.subr.mxu0 0.0
    %93 = vmatpush1.msra.mxu0 0.0
    %94 = vmatprep.subr.mxu0 0.0
    %95 = vmatpush1.msra.mxu0 0.0
    %96 = vmatprep.subr.mxu0 0.0
    %97 = vmatpush1.msra.mxu0 0.0
    %98 = vmatprep.subr.mxu0 0.0
    %99 = vmatpush1.msra.mxu0 0.0
    %100 = vmatprep.subr.mxu0 0.0
    %101 = vmatpush1.msra.mxu0 0.0
    %102 = vmatprep.subr.mxu0 0.0
    %103 = vmatpush1.msra.mxu0 0.0
    %104 = vmatprep.subr.mxu0 0.0
    %105 = vmatpush1.msra.mxu0 0.0
    %106 = vmatprep.subr.mxu0 0.0
    %107 = vmatpush1.msra.mxu0 0.0
    %108 = vmatprep.subr.mxu0 0.0
    %109 = vmatpush1.msra.mxu0 0.0
    %110 = vmatprep.subr.mxu0 0.0
    %111 = vmatpush1.msra.mxu0 0.0
    %112 = vmatprep.subr.mxu0 0.0
    %113 = vmatpush1.msra.mxu0 0.0
    %114 = vmatprep.subr.mxu0 0.0
    %115 = vmatpush1.msra.mxu0 0.0
    %116 = vmatprep.subr.mxu0 0.0
    %117 = vmatpush1.msra.mxu0 0.0
    %118 = vmatprep.subr.mxu0 0.0
    %119 = vmatpush1.msra.mxu0 0.0
    %120 = vmatprep.subr.mxu0 0.0
    %121 = vmatpush1.msra.mxu0 0.0
    %122 = vmatprep.subr.mxu0 0.0
    %123 = vmatpush1.msra.mxu0 0.0
    %124 = vmatprep.subr.mxu0 0.0
    %125 = vmatpush1.msra.mxu0 0.0
    %126 = vmatprep.subr.mxu0 0.0
    %127 = vmatpush1.msra.mxu0 0.0
    %128 = vmatprep.subr.mxu0 0.0
    %129 = vmatpush1.msra.mxu0 0.0
    %130 = vmatprep.mubr.f32.mxu0 0.0
    %131 = vmatmul.mubr.f32.gmra.mrb[0].mxu0 %v55
    %v132 = vpop.f32.mrb[0].mxu0
    %v133 = vadd.f32 %v36, %v132
    %v134 = vpop.f32.mrb[0].mxu0
    %135 = vmatprep.mubr.f32.mxu0 0.0
    %136 = vmatmul.mubr.f32.gmra.mrb[0].mxu0 %v58
    %v137 = vpop.f32.mrb[0].mxu0
    %v138 = vadd.f32 %v41, %v137
    %v139 = vpop.f32.mrb[0].mxu0
    %140 = vmatprep.mubr.f32.mxu0 0.0
    %141 = vmatmul.mubr.f32.gmra.mrb[0].mxu0 %v61
    %v142 = vpop.f32.mrb[0].mxu0
    %v143 = vadd.f32 %v46, %v142
    %v144 = vpop.f32.mrb[0].mxu0
    %145 = vmatprep.mubr.f32.mxu0 0.0
    %146 = vmatmul.mubr.f32.gmra.mrb[0].mxu0 %v64
    %v147 = vpop.f32.mrb[0].mxu0
    %v148 = vadd.f32 %v51, %v147
    %v149 = vpop.f32.mrb[0].mxu0
    %150 = vdwg.mxu0
    %v151 = vmax.f32 %v133, 0.0
    %v152 = vmax.f32 %v138, 0.0
    %v153 = vmax.f32 %v143, 0.0
    %v154 = vmax.f32 %v148, 0.0
    %v155 = vld [vmem:[%s4] sm:$0xff]
    %v156 = vld [vmem:[%s4 + $0x8] sm:$0xff]
    %v157 = vld [vmem:[%s4 + $0x10] sm:$0xff]
    %v158 = vld [vmem:[%s4 + $0x18] sm:$0xff]
    %160 = vset.pattern.permute.xlu0 0
    %161 = vperm.xlu0 %160, %v155
    %v162 = vpop.permute.xlu0 %161
    %165 = vset.pattern.permute.xlu0 0
    %166 = vperm.xlu0 %165, %v156
    %v167 = vpop.permute.xlu0 %166
    %170 = vset.pattern.permute.xlu0 0
    %171 = vperm.xlu0 %170, %v157
    %v172 = vpop.permute.xlu0 %171
    %175 = vset.pattern.permute.xlu0 0
    %176 = vperm.xlu0 %175, %v158
    %v177 = vpop.permute.xlu0 %176
    %v179 = vmul.f32 %v151, %v162
    %v180 = vmul.f32 %v152, %v167
    %v181 = vmul.f32 %v153, %v172
    %v182 = vmul.f32 %v154, %v177
    %v183 = vadd.f32 %v179, %v180
    %v184 = vadd.f32 %v183, %v181
    %v185 = vadd.f32 %v184, %v182
    %v186 = vrot.slane %v185, 4
    %v187 = vadd.f32 %v185, %v186
    %v188 = vrot.slane %v187, 2
    %v189 = vadd.f32 %v187, %v188
    %v190 = vrot.slane %v189, 1
    %v191 = vadd.f32 %v189, %v190
    %s192 = sld [smem:[#allocation4]]
    %v193 = vstv %s192
    %v194 = vadd.f32 %v191, %v193
    %v195 = vxor.u32 %v194, 2147483648
    %v196 = vmul.f32 %v195, 1.442695
    %v197 = vpow.pop %v196
    %v198 = vadd.f32 %v197, 1.0
    %v199 = vrcp.pop %v198
    %v200 = vmul.f32 1.0, %v199
    %201 = vst [vmem:[#allocation5] sm:$0x1] %v200
    // Predicated region
    $region22: #{tpu_custom_call.1} parent=1 // pred_check
      _
    $region23: #{tpu_custom_call.1} parent=1 // pred_check_branch
      %203 = sbr.rel (0) target = $region25
    $region24: #{tpu_custom_call.1} parent=1 // pred_region
      %s205 = ssub.s32 16, 16
      %206 = vsyncadd [#allocation6], %s205
      %s208 = sshll.u32 [#allocation5], 4
      %s209 = int_to_ptr.vmem [resolvable:$true] %s208
      %211 = dma.vmem_to_hbm [thread:$0]  %s209, 16, %s6, [#allocation6]
    $region25: #{tpu_custom_call.1} parent=1 // pred_fallthru
      _
    // Predicated region
    $region26: #{tpu_custom_call.1} parent=1 // pred_check
      _
    $region27: #{tpu_custom_call.1} parent=1 // pred_check_branch
      %213 = sbr.rel (0) target = $region29
    $region28: #{tpu_custom_call.1} parent=1 // pred_region
      %214 = dma.done [#allocation6], 16
    $region29: #{tpu_custom_call.1} parent=1 // pred_fallthru
      _
    %215 = vsyncpa [#allocation6], 1

</llo_original>
